<compile_context>
chip_gen: v7x
topology: tpu7x:2x2x1
jax: 0.10.0
libtpu: 0.0.40
codegen_flags: <defaults>
</compile_context>

<pallas_src>
import functools

import jax
import jax.numpy as jnp
from jax.experimental import pallas as pl
from jax.experimental.pallas import tpu as pltpu


def _patch_embed_kernel(x_ref, w_ref, b_ref, o_ref):
    # x_ref: (TILE_M, K_pad) patch rows        (pipelined over the M grid axis)
    # w_ref: (K_pad, E)      projection weight (VMEM-resident, constant map)
    # b_ref: (1, E)          bias (f32)
    # o_ref: (TILE_M, E)
    acc = jnp.dot(x_ref[...], w_ref[...], preferred_element_type=jnp.float32)
    o_ref[...] = (acc + b_ref[...]).astype(o_ref.dtype)


def _round_up(v, m):
    return ((v + m - 1) // m) * m


def _choose_tile_m(M, num_patches, row_align, target_rows, bytes_per_row,
                   byte_budget):
    """Pick tm = k * num_patches with k | (M // num_patches), so tm divides M
    exactly (no M padding) and each tile covers whole images.  tm must be
    sublane-aligned (or equal M), stay under the VMEM byte budget, and we
    prefer >= 2 grid steps (v7x has 2 TensorCores per chip)."""
    n_img = M // num_patches
    cands = sorted({k * num_patches for k in range(1, n_img + 1)
                    if n_img % k == 0
                    and ((k * num_patches) % row_align == 0
                         or k * num_patches == M)})
    if not cands:
        cands = [M]
    max_rows = min(target_rows, max(byte_budget // max(bytes_per_row, 1), 1))
    under = [t for t in cands if t <= max_rows]
    tm = max(under) if under else min(cands)
    if tm == M:  # keep both v7x TensorCores busy if a smaller divisor exists
        smaller = [t for t in cands if t < M and t <= max_rows]
        if smaller:
            tm = max(smaller)
    return tm


def patch_embed_forward(x, weight, bias, patch_size, *, compute_dtype=None,
                        out_dtype=None, tile_m=4096):
    """x: (B, C, H, W) NCHW.  weight: (E, C, ph, pw) Conv2d layout.  bias: (E,).

    Returns (B, num_patches, E) — same semantics as PatchEmbed.forward with
    norm_layer=None.  `compute_dtype` (e.g. jnp.bfloat16) casts the matmul
    operands (accumulation stays f32); `out_dtype` sets the output dtype
    (defaults to x.dtype).
    """
    B, C, H, W = x.shape
    if isinstance(patch_size, (tuple, list)):
        ph, pw = patch_size
    else:
        ph = pw = patch_size
    E = weight.shape[0]
    assert H % ph == 0 and W % pw == 0
    Hp, Wp = H // ph, W // pw
    num_patches = Hp * Wp
    K = C * ph * pw
    M = B * num_patches

    compute_dtype = jnp.dtype(x.dtype if compute_dtype is None else compute_dtype)
    out_dtype = jnp.dtype(x.dtype if out_dtype is None else out_dtype)
    in_b = compute_dtype.itemsize
    out_b = out_dtype.itemsize

    # K padded to a lane-dense multiple of 128; the zero pad rides the single
    # repack pass together with the patch transpose and the dtype cast.
    K_pad = _round_up(K, 128)

    # --- glue: non-overlapping patch extraction -> (M, K_pad) patch-major rows
    # (B, C, Hp, ph, Wp, pw) -> (B, Hp, Wp, C, ph, pw) -> (M, K) -> pad -> cast
    xp = x.reshape(B, C, Hp, ph, Wp, pw).transpose(0, 2, 4, 1, 3, 5)
    xp = xp.reshape(M, K)
    if K_pad != K:
        xp = jnp.pad(xp, ((0, 0), (0, K_pad - K)))
    xp = xp.astype(compute_dtype)

    # Conv2d weight (E, C, ph, pw) -> dense projection (K_pad, E); bias (1, E).
    w2d = weight.reshape(E, K).T
    if K_pad != K:
        w2d = jnp.pad(w2d, ((0, K_pad - K), (0, 0)))
    w2d = w2d.astype(compute_dtype)
    b2d = bias.reshape(1, E).astype(jnp.float32)

    # --- M tiling: divisor-of-M tiles (multiples of num_patches), aligned to
    # the sublane packing of the widest dtype involved.
    row_align = max(8, 32 // in_b, 32 // out_b)
    bytes_per_row = 2 * K_pad * in_b + 2 * E * out_b   # double-buffered x + out
    tm = _choose_tile_m(M, num_patches, row_align, tile_m, bytes_per_row,
                        byte_budget=24 << 20)
    n_tiles = M // tm

    # Explicit VMEM budget: double-buffered x/out tiles + weight/bias.  Clamp
    # to [16 MiB, 40 MiB] (v7x only has 64 MiB per TC) but never below the
    # actual footprint.
    footprint = tm * bytes_per_row + 2 * K_pad * E * in_b + 2 * E * 4
    vmem_limit = int(max(min(2 * footprint, 40 << 20),
                         footprint + (2 << 20), 16 << 20))

    out = pl.pallas_call(
        _patch_embed_kernel,
        out_shape=jax.ShapeDtypeStruct((M, E), out_dtype),
        grid_spec=pltpu.PrefetchScalarGridSpec(
            num_scalar_prefetch=0,
            grid=(n_tiles,),
            in_specs=[
                pl.BlockSpec((tm, K_pad), lambda i: (i, 0)),
                pl.BlockSpec((K_pad, E), lambda i: (0, 0)),   # VMEM-resident
                pl.BlockSpec((1, E), lambda i: (0, 0)),       # VMEM-resident
            ],
            out_specs=pl.BlockSpec((tm, E), lambda i: (i, 0)),
        ),
        compiler_params=pltpu.CompilerParams(
            dimension_semantics=("parallel",),   # shard M across TCs (v7x)
            vmem_limit_bytes=vmem_limit,
            allow_input_fusion=[True, False, False],  # let XLA fold the repack
        ),
    )(xp, w2d, b2d)

    # (M, E) -> (B, num_patches, E): contiguous reshape, metadata-only.
    return out.reshape(B, num_patches, E)


class PatchEmbedPallas:
    """Mirror of the PyTorch PatchEmbed module (norm_layer=None)."""

    def __init__(self, img_size=16, patch_size=4, in_chans=4, embed_dim=32,
                 key=jax.random.PRNGKey(0)):
        img_size = (img_size, img_size) if isinstance(img_size, int) else tuple(img_size)
        patch_size = ((patch_size, patch_size)
                      if isinstance(patch_size, int) else tuple(patch_size))
        self.img_size = img_size
        self.patch_size = patch_size
        self.patches_resolution = [img_size[0] // patch_size[0],
                                   img_size[1] // patch_size[1]]
        self.num_patches = self.patches_resolution[0] * self.patches_resolution[1]
        self.in_chans = in_chans
        self.embed_dim = embed_dim

        # Same parameter shapes as nn.Conv2d(in_chans, embed_dim,
        # kernel_size=patch_size, stride=patch_size): weight (E, C, ph, pw),
        # bias (E,).
        kw, kb = jax.random.split(key)
        fan_in = in_chans * patch_size[0] * patch_size[1]
        bound = 1.0 / (fan_in ** 0.5)
        self.weight = jax.random.uniform(
            kw, (embed_dim, in_chans, patch_size[0], patch_size[1]),
            jnp.float32, -bound, bound)
        self.bias = jax.random.uniform(kb, (embed_dim,), jnp.float32, -bound, bound)
        # TODO(synk): norm_layer is None in the reference config; the optional
        # LayerNorm branch is not implemented here.

    def __call__(self, x, compute_dtype=None, out_dtype=None):
        B, C, H, W = x.shape
        assert H == self.img_size[0] and W == self.img_size[1], (
            f"Input image size ({H}*{W}) doesn't match model "
            f"({self.img_size[0]}*{self.img_size[1]}).")
        return patch_embed_forward(x, self.weight, self.bias, self.patch_size,
                                   compute_dtype=compute_dtype,
                                   out_dtype=out_dtype)


if __name__ == "__main__":
    key = jax.random.PRNGKey(0)
    k_x, k_params = jax.random.split(key)

    # Small shapes: B=2, C=4, H=W=16, patch=4 -> 16 patches, embed_dim=32.
    B, C, H, W = 2, 4, 16, 16
    x = jax.random.normal(k_x, (B, C, H, W), jnp.float32)

    model = PatchEmbedPallas(img_size=16, patch_size=4, in_chans=C,
                             embed_dim=32, key=k_params)

    # f32 path — strict check against the plain-JAX conv reference.
    fwd_f32 = jax.jit(model.__call__)
    out = jax.block_until_ready(fwd_f32(x))
    assert out.shape == (B, model.num_patches, model.embed_dim), out.shape

    # Reference: plain-JAX conv with kernel=stride=patch (== nn.Conv2d).
    ref = jax.lax.conv_general_dilated(
        x, model.weight, window_strides=model.patch_size, padding="VALID",
        dimension_numbers=("NCHW", "OIHW", "NCHW"))
    ref = ref + model.bias.reshape(1, -1, 1, 1)
    ref = ref.reshape(B, model.embed_dim, -1).transpose(0, 2, 1)
    assert jnp.allclose(out, ref, atol=1e-5, rtol=1e-5), (
        float(jnp.max(jnp.abs(out - ref))))

    # bf16 fast path: bf16 operands AND bf16 output (f32 MXU accumulation).
    fwd_bf16 = jax.jit(functools.partial(
        model.__call__, compute_dtype=jnp.bfloat16, out_dtype=jnp.bfloat16))
    out_bf16 = jax.block_until_ready(fwd_bf16(x))
    assert out_bf16.shape == out.shape
    assert out_bf16.dtype == jnp.bfloat16
    assert jnp.allclose(out_bf16.astype(jnp.float32), ref,
                        atol=5e-2, rtol=5e-2), (
        float(jnp.max(jnp.abs(out_bf16.astype(jnp.float32) - ref))))

    print("KERNEL_OK")
</pallas_src>

<mosaic_0001>
module attributes {stable_mosaic.version = 11 : i64} {
  func.func @_patch_embed_kernel(%arg0: i32, %arg1: memref<16x128xf32, #tpu.memory_space<vmem>>, %arg2: memref<128x32xf32, #tpu.memory_space<vmem>>, %arg3: memref<1x32xf32, #tpu.memory_space<vmem>>, %arg4: memref<16x32xf32, #tpu.memory_space<vmem>>) attributes {dimension_semantics = [#tpu.dimension_semantics<parallel>], iteration_bounds = array<i64: 2>, scalar_prefetch = 0 : i64, scratch_operands = 0 : i64, tpu.core_type = #tpu.core_type<tc>, window_params = [{transform_indices = @transform_0, window_bounds = array<i64: 16, 128>}, {pipeline_mode = #tpu.pipeline_mode<synchronous>, transform_indices = @transform_1, window_bounds = array<i64: 128, 32>}, {pipeline_mode = #tpu.pipeline_mode<synchronous>, transform_indices = @transform_2, window_bounds = array<i64: 1, 32>}, {transform_indices = @transform_3, window_bounds = array<i64: 16, 32>}]} {
    %c0 = arith.constant 0 : index
    %c0_0 = arith.constant 0 : index
    %0 = vector.load %arg1[%c0, %c0_0] : memref<16x128xf32, #tpu.memory_space<vmem>>, vector<16x128xf32>
    %c0_1 = arith.constant 0 : index
    %c0_2 = arith.constant 0 : index
    %1 = vector.load %arg2[%c0_1, %c0_2] : memref<128x32xf32, #tpu.memory_space<vmem>>, vector<128x32xf32>
    %cst = arith.constant dense<0.000000e+00> : vector<16x32xf32>
    %2 = tpu.matmul %0, %1, %cst {dimension_numbers = #tpu.dot_dimension_numbers<[1], [0], [0], [1], [0, 0, 1, 1], [], []>} : vector<16x128xf32>, vector<128x32xf32>, vector<16x32xf32> -> vector<16x32xf32>
    %c0_3 = arith.constant 0 : index
    %c0_4 = arith.constant 0 : index
    %3 = vector.load %arg3[%c0_3, %c0_4] : memref<1x32xf32, #tpu.memory_space<vmem>>, vector<1x32xf32>
    %4 = vector.broadcast %3 : vector<1x32xf32> to vector<16x32xf32>
    %5 = arith.addf %2, %4 : vector<16x32xf32>
    %c0_5 = arith.constant 0 : index
    %c0_6 = arith.constant 0 : index
    %6 = vector.load %arg4[%c0_5, %c0_6] : memref<16x32xf32, #tpu.memory_space<vmem>>, vector<16x32xf32>
    tpu.vector_store %arg4[%c0_5, %c0_6], %5 {strides = array<i32>} : memref<16x32xf32, #tpu.memory_space<vmem>>, vector<16x32xf32>,
    return
  }
  func.func @transform_0(%arg0: i32) -> (i32, i32) {
    %c0_i32 = arith.constant 0 : i32
    %c0_i32_0 = arith.constant 0 : i32
    return %arg0, %c0_i32 : i32, i32
  }
  func.func @transform_1(%arg0: i32) -> (i32, i32) {
    %c0_i32 = arith.constant 0 : i32
    %c0_i32_0 = arith.constant 0 : i32
    %c0_i32_1 = arith.constant 0 : i32
    return %c0_i32, %c0_i32_0 : i32, i32
  }
  func.func @transform_2(%arg0: i32) -> (i32, i32) {
    %c0_i32 = arith.constant 0 : i32
    %c0_i32_0 = arith.constant 0 : i32
    %c0_i32_1 = arith.constant 0 : i32
    return %c0_i32, %c0_i32_0 : i32, i32
  }
  func.func @transform_3(%arg0: i32) -> (i32, i32) {
    %c0_i32 = arith.constant 0 : i32
    %c0_i32_0 = arith.constant 0 : i32
    return %arg0, %c0_i32 : i32, i32
  }
}

</mosaic_0001>

<llo_original>
// kernel: a_call__.2
$region0: #{a_call__.2}
  #allocation0 [shape = 'u32[]', space=smem, size = 0x4, offset = 0x4, fixed_abs, tag = 'smem constant byte address 0x4 - core index']
  #allocation1 [shape = 'u32[144,128]{1,0:T(1,128)}', space=vmem, size = 0x12000, scoped, tag = 'internal scratch']
  #allocation2 [shape = 'u32[2048]{0}', space=vmem, size = 0x2000, scoped, tag = 'scoped memory for a_call__.2']
  #allocation3 [shape = 'u32[2048]{0}', space=vmem, size = 0x2000, scoped, tag = 'scoped memory for a_call__.2']
  #allocation4 [shape = 'u32[2048]{0}', space=vmem, size = 0x2000, scoped, tag = 'scoped memory for a_call__.2']
  #allocation5 [shape = 'u32[2048]{0}', space=vmem, size = 0x2000, scoped, tag = 'scoped memory for a_call__.2']
  #allocation6 [shape = 'u32[2048]{0}', space=vmem, size = 0x2000, scoped, tag = 'scoped memory for a_call__.2']
  %s0 = inlined_call_operand.vmem [shape: f32[128,32], index: 0, kind: input, shape index: {}]
  %s1 = inlined_call_operand.vmem [shape: f32[1,32], index: 1, kind: input, shape index: {}]
  %s2 = inlined_call_operand.vmem [shape: f32[32,64], index: 2, kind: input, shape index: {}]
  %s3 = inlined_call_operand.<no memory space> [shape: f32[], index: 3, kind: input, shape index: {}]
  %s4 = inlined_call_operand.hbm [shape: f32[32,32], index: 4, kind: output, shape index: {}]
  %s5 = sld [smem:[#allocation0]]
  $region45: #{a_call__.2} parent=0
    _
  %s7 = ssub.s32 1, %s5
  %s8 = scalar_select 0, %s7, %s5
  %v9 = vstv %s3
  $region1: #{a_call__.2} parent=0
    #allocation7 [shape = 'u8[16384]{0}', space=vmem, size = 0x4000, scoped, tag = 'output window, operand 0']
    #allocation8 [shape = 's32[2]{0}', space=sflag, size = 0x8, scoped, tag = 'scoped memory for a_call__.2']
    %10 = vsyncpa [#allocation8], 0
    %s11 = scalar_lea.sflag [#allocation8], 1
    %12 = vsyncpa %s11, 0
    loop: start=0, step=1, limit=4
    $region2: #{a_call__.2} parent=1 // loop_pre_header
      _
    $region3: #{a_call__.2} parent=1 // loop_header
      %s14 = sphi 0, %s18
      %p15 = scmp.ge.s32.totalorder %s14, 4
      %s24 = sphi 0, %s26
      %s27 = sphi 0, %s24
      %s28 = sphi 0, %s27
      %s44 = sphi 0, %s28
      %s48 = sphi 0, %s48
      %s50 = sphi 0, %s48
      %s51 = sphi 0, %s50
      %s65 = sphi 0, %s51
      %s69 = sphi 0, %s69
      %s71 = sphi 0, %s69
      %s72 = sphi 0, %s71
      %s86 = sphi 0, %s72
      %s92 = sphi 0, %s94
      %s95 = sphi 0, %s92
      %s96 = sphi 0, %s95
      %s112 = sphi 0, %s96
    $region4: #{a_call__.2} parent=1 // loop_header_branch
      %17 = sbr.rel (%p15) target = $region8
    $region5: #{a_call__.2} parent=1 // loop_body
      %s19 = ssub.s32 %s14, 1
      %s20 = ssub.s32 %s14, 2
      %s21 = sadd.s32 %s14, 1
      %s22 = ssub.s32 %s14, %s21
      %p23 = scmp.eq.s32.totalorder %s22, 0
      %s25 = sadd.s32 %s24, 1
      %s26 = scalar_select %p23, %s24, %s25
      %p29 = pneg %p23
      %p30 = scmp.eq.s32.totalorder %s14, 1
      %p31 = por %p29, %p30
      %p32 = scmp.ne.s32.totalorder %s24, %s27
      %p33 = scmp.eq.s32.totalorder %s14, 0
      %p34 = por %p32, %p33
      %p35 = scmp.ne.s32.totalorder %s24, %s27
      %p36 = scmp.eq.s32.totalorder %s19, 1
      %p37 = por %p35, %p36
      %p38 = scmp.ne.s32.totalorder %s27, %s28
      %p39 = scmp.eq.s32.totalorder %s19, 0
      %p40 = por %p38, %p39
      %p41 = scmp.ne.s32.totalorder %s27, %s28
      %p42 = scmp.eq.s32.totalorder %s20, 1
      %p43 = por %p41, %p42
      %p45 = scmp.ne.s32.totalorder %s28, %s44
      %p46 = scmp.eq.s32.totalorder %s20, 0
      %p47 = por %p45, %p46
      %s49 = sadd.s32 %s48, 1
      %p52 = scmp.eq.s32.totalorder %s14, 1
      %p53 = scmp.ne.s32.totalorder %s48, %s50
      %p54 = scmp.eq.s32.totalorder %s14, 0
      %p55 = por %p53, %p54
      %p56 = scmp.ne.s32.totalorder %s48, %s50
      %p57 = scmp.eq.s32.totalorder %s19, 1
      %p58 = por %p56, %p57
      %p59 = scmp.ne.s32.totalorder %s50, %s51
      %p60 = scmp.eq.s32.totalorder %s19, 0
      %p61 = por %p59, %p60
      %p62 = scmp.ne.s32.totalorder %s50, %s51
      %p63 = scmp.eq.s32.totalorder %s20, 1
      %p64 = por %p62, %p63
      %p66 = scmp.ne.s32.totalorder %s51, %s65
      %p67 = scmp.eq.s32.totalorder %s20, 0
      %p68 = por %p66, %p67
      %s70 = sadd.s32 %s69, 1
      %p73 = scmp.eq.s32.totalorder %s14, 1
      %p74 = scmp.ne.s32.totalorder %s69, %s71
      %p75 = scmp.eq.s32.totalorder %s14, 0
      %p76 = por %p74, %p75
      %p77 = scmp.ne.s32.totalorder %s69, %s71
      %p78 = scmp.eq.s32.totalorder %s19, 1
      %p79 = por %p77, %p78
      %p80 = scmp.ne.s32.totalorder %s71, %s72
      %p81 = scmp.eq.s32.totalorder %s19, 0
      %p82 = por %p80, %p81
      %p83 = scmp.ne.s32.totalorder %s71, %s72
      %p84 = scmp.eq.s32.totalorder %s20, 1
      %p85 = por %p83, %p84
      %p87 = scmp.ne.s32.totalorder %s72, %s86
      %p88 = scmp.eq.s32.totalorder %s20, 0
      %p89 = por %p87, %p88
      %s90 = ssub.s32 %s14, %s21
      %p91 = scmp.eq.s32.totalorder %s90, 0
      %s93 = sadd.s32 %s92, 1
      %s94 = scalar_select %p91, %s92, %s93
      %p97 = pneg %p91
      %p98 = scmp.eq.s32.totalorder %s14, 1
      %p99 = por %p97, %p98
      %p100 = scmp.ne.s32.totalorder %s92, %s95
      %p101 = scmp.eq.s32.totalorder %s14, 0
      %p102 = por %p100, %p101
      %p103 = scmp.ne.s32.totalorder %s92, %s95
      %p104 = scmp.eq.s32.totalorder %s19, 1
      %p105 = por %p103, %p104
      %p106 = scmp.ne.s32.totalorder %s95, %s96
      %p107 = scmp.eq.s32.totalorder %s19, 0
      %p108 = por %p106, %p107
      %p109 = scmp.ne.s32.totalorder %s95, %s96
      %p110 = scmp.eq.s32.totalorder %s20, 1
      %p111 = por %p109, %p110
      %p113 = scmp.ne.s32.totalorder %s96, %s112
      %p114 = scmp.eq.s32.totalorder %s20, 0
      %p115 = por %p113, %p114
      %p116 = scmp.le.s32.totalorder 1, %s14
      %p117 = scmp.lt.s32.totalorder %s14, 3
      %p118 = pnand %p116, %p117
      %p119 = pneg %p118
      // Predicated region
      $region9: #{a_call__.2} parent=5 // pred_check
        _
      $region10: #{a_call__.2} parent=5 // pred_check_branch
        %121 = sbr.rel (%p118) target = $region12
      $region11: #{a_call__.2} parent=5 // pred_region
        %s122 = ssub.s32 %s14, 1
        // Predicated region
        $region13: #{a_call__.2} parent=11 // pred_check
          %p123 = pneg %p61
        $region14: #{a_call__.2} parent=11 // pred_check_branch
          %125 = sbr.rel (%p123) target = $region16
        $region15: #{a_call__.2} parent=11 // pred_region
          _
        $region16: #{a_call__.2} parent=11 // pred_fallthru
          _
        // Predicated region
        $region17: #{a_call__.2} parent=11 // pred_check
          %p126 = pneg %p82
        $region18: #{a_call__.2} parent=11 // pred_check_branch
          %128 = sbr.rel (%p126) target = $region20
        $region19: #{a_call__.2} parent=11 // pred_region
          _
        $region20: #{a_call__.2} parent=11 // pred_fallthru
          _
      $region12: #{a_call__.2} parent=5 // pred_fallthru
        _
      %p129 = scmp.lt.s32.totalorder %s14, 2
      // Predicated region
      $region21: #{a_call__.2} parent=5 // pred_check
        %p130 = pneg %p129
      $region22: #{a_call__.2} parent=5 // pred_check_branch
        %132 = sbr.rel (%p130) target = $region24
      $region23: #{a_call__.2} parent=5 // pred_region
        // Predicated region
        $region25: #{a_call__.2} parent=23 // pred_check
          %p133 = pneg %p34
        $region26: #{a_call__.2} parent=23 // pred_check_branch
          %135 = sbr.rel (%p133) target = $region28
        $region27: #{a_call__.2} parent=23 // pred_region
          %s136 = smul.u32 2, %s14
          %p137 = scmp.lt.s32.totalorder %s136, 3
          %s138 = scalar_select %p137, %s136, 3
          %s139 = smul.addr %s138, 8
          %s140 = scalar_lea.vmem %s2, %s139
          %s141 = smul.u32 2, %s14
        $region28: #{a_call__.2} parent=23 // pred_fallthru
          _
      $region24: #{a_call__.2} parent=5 // pred_fallthru
        _
      %p142 = scmp.le.s32.totalorder 1, %s14
      %p143 = scmp.lt.s32.totalorder %s14, 3
      %p144 = pnand %p142, %p143
      %p145 = pneg %p144
      // Predicated region
      $region29: #{a_call__.2} parent=5 // pred_check
        _
      $region30: #{a_call__.2} parent=5 // pred_check_branch
        %147 = sbr.rel (%p144) target = $region32
      $region31: #{a_call__.2} parent=5 // pred_region
        #allocation9 [shape = 'u8[8192]{0}', space=vmem, size = 0x2000, dematerialized = true, scoped, tag = 'FusionAdapter Buffer %fusion.1 = f32[32,128]{1,0:T(8,128)} fusion(%param_2.1, %param_3), kind=kLoop, calls=%fused_computation.2.clone, metadata={op_name="jit(__call__)/jit(_pad)/pad" stack_frame_id=11}']
        %s148 = ssub.s32 %s14, 1
        %s149 = smul.u32 2, %s19
        %p150 = scmp.lt.s32.totalorder %s149, 3
        %s151 = scalar_select %p150, %s149, 3
        %s152 = smul.addr %s151, 8
        %s153 = scalar_lea.vmem %s2, %s152
        %p154 = pneg %p40
        %p155 = pneg %p37
        %p156 = pneg %p61
        %p157 = pneg %p58
        %p158 = pneg %p82
        %p159 = pneg %p79
        %p160 = pneg %p108
        %p161 = pneg %p105
        %s162 = sand.u32 %s95, 1
        %s163 = scalar_lea.sflag [#allocation8], %s162
        %s164 = sand.u32 %s95, 1
        %s165 = smul.addr %s164, 16
        %s166 = scalar_lea.vmem [#allocation7], %s165
        %s167 = smul.u32 2, %s19
        %p168 = scmp.lt.s32.totalorder %s167, 3
        %s169 = scalar_select %p168, %s167, 3
        %s170 = smul.addr %s169, 8
        %s171 = scalar_lea.vmem %s2, %s170
        %s172 = smul.u32 2, %s19
        %s173 = smul.u32 2, %s19
        %v174 = vld [vmem:[%s171] sm:$0xff]
        %v175 = vlaneseq
        %v176 = vand.u32 %v175, 127
        %vm178 = vcmp.lt.s32.totalorder %v176, 64
        %v179 = vsel %vm178, %v174, %v9
        %181 = vst [vmem:[#allocation9] sm:$0xff] %v179
        %s182 = scalar_lea.vmem %s171, 8
        %v183 = vld [vmem:[%s182] sm:$0xff]
        %v184 = vlaneseq
        %v185 = vand.u32 %v184, 127
        %vm187 = vcmp.lt.s32.totalorder %v185, 64
        %v188 = vsel %vm187, %v183, %v9
        %s189 = scalar_lea.vmem [#allocation9], 8
        %191 = vst [vmem:[%s189] sm:$0xff] %v188
        %v192 = vld [vmem:[#allocation9] sm:$0xff]
        %v193 = vld [vmem:[#allocation9 + $0x8] sm:$0xff]
        %v194 = vld [vmem:[%s0] sm:$0xff]
        %v195 = vld [vmem:[%s0 + $0x8] sm:$0xff]
        %v196 = vld [vmem:[%s0 + $0x10] sm:$0xff]
        %v197 = vld [vmem:[%s0 + $0x18] sm:$0xff]
        %v198 = vld [vmem:[%s0 + $0x20] sm:$0xff]
        %v199 = vld [vmem:[%s0 + $0x28] sm:$0xff]
        %v200 = vld [vmem:[%s0 + $0x30] sm:$0xff]
        %v201 = vld [vmem:[%s0 + $0x38] sm:$0xff]
        %v202 = vld [vmem:[%s0 + $0x40] sm:$0xff]
        %v203 = vld [vmem:[%s0 + $0x48] sm:$0xff]
        %v204 = vld [vmem:[%s0 + $0x50] sm:$0xff]
        %v205 = vld [vmem:[%s0 + $0x58] sm:$0xff]
        %v206 = vld [vmem:[%s0 + $0x60] sm:$0xff]
        %v207 = vld [vmem:[%s0 + $0x68] sm:$0xff]
        %v208 = vld [vmem:[%s0 + $0x70] sm:$0xff]
        %v209 = vld [vmem:[%s0 + $0x78] sm:$0xff]
        %v210 = vld [vmem:[%s1] sm:$0x1]
        %v212 = vlaneseq
        %v213 = vshrl.u32 %v212, 7
        %v214 = vsub.s32 0, %v213
        %v215 = vrot.slane %v210, %v214
        %217 = vmatprep.subr.mxu0 0.0
        %218 = vmatpush1.msra.mxu0 %v194
        %219 = vmatprep.subr.mxu0 0.0
        %220 = vmatpush1.msra.mxu0 %v195
        %221 = vmatprep.subr.mxu0 0.0
        %222 = vmatpush1.msra.mxu0 %v196
        %223 = vmatprep.subr.mxu0 0.0
        %224 = vmatpush1.msra.mxu0 %v197
        %225 = vmatprep.subr.mxu0 0.0
        %226 = vmatpush1.msra.mxu0 %v198
        %227 = vmatprep.subr.mxu0 0.0
        %228 = vmatpush1.msra.mxu0 %v199
        %229 = vmatprep.subr.mxu0 0.0
        %230 = vmatpush1.msra.mxu0 %v200
        %231 = vmatprep.subr.mxu0 0.0
        %232 = vmatpush1.msra.mxu0 %v201
        %233 = vmatprep.subr.mxu0 0.0
        %234 = vmatpush1.msra.mxu0 %v202
        %235 = vmatprep.subr.mxu0 0.0
        %236 = vmatpush1.msra.mxu0 %v203
        %237 = vmatprep.subr.mxu0 0.0
        %238 = vmatpush1.msra.mxu0 %v204
        %239 = vmatprep.subr.mxu0 0.0
        %240 = vmatpush1.msra.mxu0 %v205
        %241 = vmatprep.subr.mxu0 0.0
        %242 = vmatpush1.msra.mxu0 %v206
        %243 = vmatprep.subr.mxu0 0.0
        %244 = vmatpush1.msra.mxu0 %v207
        %245 = vmatprep.subr.mxu0 0.0
        %246 = vmatpush1.msra.mxu0 %v208
        %247 = vmatprep.subr.mxu0 0.0
        %248 = vmatpush1.msra.mxu0 %v209
        %249 = vmatprep.subr.mxu0 0.0
        %250 = vmatpush1.msra.mxu0 0.0
        %251 = vmatprep.subr.mxu0 0.0
        %252 = vmatpush1.msra.mxu0 0.0
        %253 = vmatprep.subr.mxu0 0.0
        %254 = vmatpush1.msra.mxu0 0.0
        %255 = vmatprep.subr.mxu0 0.0
        %256 = vmatpush1.msra.mxu0 0.0
        %257 = vmatprep.subr.mxu0 0.0
        %258 = vmatpush1.msra.mxu0 0.0
        %259 = vmatprep.subr.mxu0 0.0
        %260 = vmatpush1.msra.mxu0 0.0
        %261 = vmatprep.subr.mxu0 0.0
        %262 = vmatpush1.msra.mxu0 0.0
        %263 = vmatprep.subr.mxu0 0.0
        %264 = vmatpush1.msra.mxu0 0.0
        %265 = vmatprep.subr.mxu0 0.0
        %266 = vmatpush1.msra.mxu0 0.0
        %267 = vmatprep.subr.mxu0 0.0
        %268 = vmatpush1.msra.mxu0 0.0
        %269 = vmatprep.subr.mxu0 0.0
        %270 = vmatpush1.msra.mxu0 0.0
        %271 = vmatprep.subr.mxu0 0.0
        %272 = vmatpush1.msra.mxu0 0.0
        %273 = vmatprep.subr.mxu0 0.0
        %274 = vmatpush1.msra.mxu0 0.0
        %275 = vmatprep.subr.mxu0 0.0
        %276 = vmatpush1.msra.mxu0 0.0
        %277 = vmatprep.subr.mxu0 0.0
        %278 = vmatpush1.msra.mxu0 0.0
        %279 = vmatprep.subr.mxu0 0.0
        %280 = vmatpush1.msra.mxu0 0.0
        %281 = vmatprep.mubr.f32.mxu0 0.0
        %282 = vmatmul.mubr.f32.gmra.mrb[0].mxu0 %v192
        %v283 = vpop.f32.mrb[0].mxu0
        %v284 = vadd.f32 %v215, %v283
        %v285 = vpop.f32.mrb[0].mxu0
        %286 = vmatprep.mubr.f32.mxu0 0.0
        %287 = vmatmul.mubr.f32.gmra.mrb[0].mxu0 %v193
        %v288 = vpop.f32.mrb[0].mxu0
        %v289 = vadd.f32 %v215, %v288
        %v290 = vpop.f32.mrb[0].mxu0
        %291 = vdwg.mxu0
        %vm292 = vcmask 261120
        %293 = vst.msk [vmem:[%s166] sm:$0xff] %vm292, %v284
        %294 = vst.msk [vmem:[%s166 + $0x8] sm:$0xff] %vm292, %v289
        %s295 = sand.u32 %s95, 1
        %s296 = scalar_lea.sflag [#allocation8], %s295
        %s297 = sand.u32 %s95, 1
        %s298 = smul.addr %s297, 16
        %s299 = scalar_lea.vmem [#allocation7], %s298
        // Predicated region
        $region33: #{a_call__.2} parent=31 // pred_check
          %p300 = pneg %p105
        $region34: #{a_call__.2} parent=31 // pred_check_branch
          %302 = sbr.rel (%p300) target = $region36
        $region35: #{a_call__.2} parent=31 // pred_region
          %s303 = smul.u32 2, %s19
          %s305 = ssub.s32 256, 256
          %306 = vsyncadd %s296, %s305
          %s307 = smul.addr %s303, 128
          %s308 = scalar_lea.hbm %s4, %s307
          %s309 = sshll.u32 %s299, 4
          %s310 = int_to_ptr.vmem [resolvable:$true] %s309
          %315 = dma.vmem_to_hbm [thread:$0]  %s310, 256, %s308, %s296, 128, 128, 8
        $region36: #{a_call__.2} parent=31 // pred_fallthru
          _
      $region32: #{a_call__.2} parent=5 // pred_fallthru
        _
      %p316 = scmp.le.s32.totalorder 2, %s14
      // Predicated region
      $region37: #{a_call__.2} parent=5 // pred_check
        %p317 = pneg %p316
      $region38: #{a_call__.2} parent=5 // pred_check_branch
        %319 = sbr.rel (%p317) target = $region40
      $region39: #{a_call__.2} parent=5 // pred_region
        %s320 = ssub.s32 %s14, 2
        // Predicated region
        $region41: #{a_call__.2} parent=39 // pred_check
          %p321 = pneg %p111
        $region42: #{a_call__.2} parent=39 // pred_check_branch
          %323 = sbr.rel (%p321) target = $region44
        $region43: #{a_call__.2} parent=39 // pred_region
          %s324 = sand.u32 %s96, 1
          %s325 = scalar_lea.sflag [#allocation8], %s324
          %s326 = sand.u32 %s96, 1
          %s327 = smul.addr %s326, 16
          %s328 = scalar_lea.vmem [#allocation7], %s327
          %329 = dma.done %s325, 256
        $region44: #{a_call__.2} parent=39 // pred_fallthru
          _
      $region40: #{a_call__.2} parent=5 // pred_fallthru
        _
    $region6: #{a_call__.2} parent=1 // loop_footer
      %s18 = sadd.s32 1, %s14
    $region7: #{a_call__.2} parent=1 // loop_footer_branch
      %13 = sbr.rel target = $region3
    $region8: #{a_call__.2} parent=1 // loop_exit
      _
    %330 = vsyncpa [#allocation8], 1
    %s331 = scalar_lea.sflag [#allocation8], 1
    %332 = vsyncpa %s331, 1

</llo_original>
